<compile_context>
chip_gen: v5e
topology: v5e:2x2
jax: 0.10.0
libtpu: 0.0.40
codegen_flags: <defaults>
</compile_context>

<pallas_src>
import jax
import jax.numpy as jnp
from jax.experimental import pallas as pl
from jax.experimental.pallas import tpu as pltpu

HIDDEN = 512
EPS = 1e-5


def add_and_norm_kernel(x_ref, y_ref, gamma_ref, beta_ref, o_ref):
    # x_ref / y_ref / o_ref: (tile, HIDDEN) blocks in VMEM.
    # gamma_ref / beta_ref: (1, HIDDEN) resident blocks, already f32.
    s = x_ref[...].astype(jnp.float32) + y_ref[...].astype(jnp.float32)
    mean = jnp.mean(s, axis=-1, keepdims=True)
    centered = s - mean
    var = jnp.mean(centered * centered, axis=-1, keepdims=True)
    inv_std = jax.lax.rsqrt(var + EPS)
    o_ref[...] = (centered * inv_std * gamma_ref[...] + beta_ref[...]).astype(o_ref.dtype)


def _round_up(v, m):
    return ((v + m - 1) // m) * m


def _default_row_tile():
    # Bigger tile on v7x (faster HBM -> per-step overhead matters more).
    try:
        kind = jax.devices()[0].device_kind.lower()
    except Exception:
        return 1024
    return 2048 if "v7" in kind else 1024


def add_and_norm(orig_input, sublayer_output, gamma, beta, *, tm=None):
    if orig_input.shape != sublayer_output.shape:
        raise ValueError("Tensors must be the same shape to be added and normed")
    orig_shape = orig_input.shape
    if orig_shape[-1] != HIDDEN:
        raise ValueError(f"last dim must be {HIDDEN} (LayerNorm({HIDDEN}))")

    x2d = orig_input.reshape(-1, HIDDEN)
    y2d = sublayer_output.reshape(-1, HIDDEN)
    rows = x2d.shape[0]

    if tm is None:
        tm = _default_row_tile()
    tm = max(8, _round_up(tm, 8))

    # Tile selection:
    #   * as large as tm (HBM-roofline throughput),
    #   * capped at ceil(rows/2) so the grid has >= 2 steps when possible
    #     (keeps both v7x TensorCores busy via the "parallel" axis),
    #   * multiple of 8 sublanes, never larger than the rounded-up row count.
    half = _round_up(pl.cdiv(rows, 2), 16)
    tile = max(8, min(tm, half, _round_up(rows, 8)))

    grid = pl.cdiv(rows, tile)  # ragged last block handled by masked partial IO

    # Pre-cast params to f32 so the kernel does no per-tile cast.
    gamma2d = gamma.reshape(1, HIDDEN).astype(jnp.float32)
    beta2d = beta.reshape(1, HIDDEN).astype(jnp.float32)

    out2d = pl.pallas_call(
        add_and_norm_kernel,
        out_shape=jax.ShapeDtypeStruct((rows, HIDDEN), orig_input.dtype),
        grid_spec=pltpu.PrefetchScalarGridSpec(
            num_scalar_prefetch=0,
            grid=(grid,),
            in_specs=[
                pl.BlockSpec((tile, HIDDEN), lambda i: (i, 0)),
                pl.BlockSpec((tile, HIDDEN), lambda i: (i, 0)),
                pl.BlockSpec((1, HIDDEN), lambda i: (0, 0)),  # resident across grid
                pl.BlockSpec((1, HIDDEN), lambda i: (0, 0)),  # resident across grid
            ],
            out_specs=pl.BlockSpec((tile, HIDDEN), lambda i: (i, 0)),
        ),
        compiler_params=pltpu.CompilerParams(
            dimension_semantics=("parallel",),
            vmem_limit_bytes=32 * 1024 * 1024,
        ),
    )(x2d, y2d, gamma2d, beta2d)

    return out2d.reshape(orig_shape)


def reference_add_and_norm(x, y, gamma, beta):
    s = x.astype(jnp.float32) + y.astype(jnp.float32)
    mean = jnp.mean(s, axis=-1, keepdims=True)
    var = jnp.mean((s - mean) ** 2, axis=-1, keepdims=True)
    normed = (s - mean) * jax.lax.rsqrt(var + EPS)
    return (normed * gamma.astype(jnp.float32) + beta.astype(jnp.float32)).astype(x.dtype)


if __name__ == "__main__":
    key = jax.random.PRNGKey(0)
    k1, k2, k3, k4 = jax.random.split(key, 4)

    # nn.LayerNorm default init: weight = ones, bias = zeros (deterministic).
    gamma = jnp.ones((HIDDEN,), dtype=jnp.float32)
    beta = jnp.zeros((HIDDEN,), dtype=jnp.float32)

    # 1) Small f32 case (batch=2, seq=8, hidden=512); tile divides evenly.
    x = jax.random.normal(k1, (2, 8, HIDDEN), dtype=jnp.float32)
    y = jax.random.normal(k2, (2, 8, HIDDEN), dtype=jnp.float32)
    out = jax.block_until_ready(add_and_norm(x, y, gamma, beta))
    ref = reference_add_and_norm(x, y, gamma, beta)
    assert out.shape == x.shape and out.dtype == x.dtype
    assert jnp.allclose(out, ref, atol=1e-4, rtol=1e-4)

    # 2) Ragged grid (rows=21, tile=16 -> masked partial last block) with a
    #    large DC offset to stress the variance computation.
    x = jax.random.normal(k3, (3, 7, HIDDEN), dtype=jnp.float32) + 100.0
    y = jax.random.normal(k4, (3, 7, HIDDEN), dtype=jnp.float32) * 0.1
    out = jax.block_until_ready(add_and_norm(x, y, gamma, beta))
    ref = reference_add_and_norm(x, y, gamma, beta)
    assert out.shape == x.shape
    assert jnp.allclose(out, ref, atol=1e-3, rtol=1e-3)

    # 3) bf16 I/O (halves HBM traffic); f32 accumulation inside the kernel.
    xb = x.astype(jnp.bfloat16)
    yb = y.astype(jnp.bfloat16)
    outb = jax.block_until_ready(add_and_norm(xb, yb, gamma, beta))
    refb = reference_add_and_norm(xb, yb, gamma, beta)
    assert outb.dtype == jnp.bfloat16
    assert jnp.allclose(outb.astype(jnp.float32), refb.astype(jnp.float32),
                        atol=3e-2, rtol=3e-2)

    print("KERNEL_OK")
</pallas_src>

<mosaic_0001>
module attributes {stable_mosaic.version = 11 : i64} {
  func.func @add_and_norm_kernel(%arg0: i32, %arg1: memref<16x512xf32, #tpu.memory_space<vmem>>, %arg2: memref<16x512xf32, #tpu.memory_space<vmem>>, %arg3: memref<1x512xf32, #tpu.memory_space<vmem>>, %arg4: memref<1x512xf32, #tpu.memory_space<vmem>>, %arg5: memref<16x512xf32, #tpu.memory_space<vmem>>) attributes {dimension_semantics = [#tpu.dimension_semantics<parallel>], iteration_bounds = array<i64: 1>, scalar_prefetch = 0 : i64, scratch_operands = 0 : i64, tpu.core_type = #tpu.core_type<tc>, window_params = [{transform_indices = @transform_0, window_bounds = array<i64: 16, 512>}, {transform_indices = @transform_1, window_bounds = array<i64: 16, 512>}, {pipeline_mode = #tpu.pipeline_mode<synchronous>, transform_indices = @transform_2, window_bounds = array<i64: 1, 512>}, {pipeline_mode = #tpu.pipeline_mode<synchronous>, transform_indices = @transform_3, window_bounds = array<i64: 1, 512>}, {transform_indices = @transform_4, window_bounds = array<i64: 16, 512>}]} {
    %c0 = arith.constant 0 : index
    %c0_0 = arith.constant 0 : index
    %0 = vector.load %arg1[%c0, %c0_0] : memref<16x512xf32, #tpu.memory_space<vmem>>, vector<16x512xf32>
    %c0_1 = arith.constant 0 : index
    %c0_2 = arith.constant 0 : index
    %1 = vector.load %arg2[%c0_1, %c0_2] : memref<16x512xf32, #tpu.memory_space<vmem>>, vector<16x512xf32>
    %2 = arith.addf %0, %1 : vector<16x512xf32>
    %cst = arith.constant dense<0.000000e+00> : vector<16xf32>
    %3 = vector.multi_reduction <add>, %2, %cst [1] : vector<16x512xf32> to vector<16xf32>
    %4 = vector.shape_cast %3 : vector<16xf32> to vector<16x1xf32>
    %cst_3 = arith.constant 5.120000e+02 : f32
    %5 = vector.broadcast %cst_3 : f32 to vector<16x1xf32>
    %6 = arith.divf %4, %5 : vector<16x1xf32>
    %7 = vector.broadcast %6 : vector<16x1xf32> to vector<16x512xf32>
    %8 = arith.subf %2, %7 : vector<16x512xf32>
    %9 = arith.mulf %8, %8 : vector<16x512xf32>
    %cst_4 = arith.constant dense<0.000000e+00> : vector<16xf32>
    %10 = vector.multi_reduction <add>, %9, %cst_4 [1] : vector<16x512xf32> to vector<16xf32>
    %11 = vector.shape_cast %10 : vector<16xf32> to vector<16x1xf32>
    %cst_5 = arith.constant 5.120000e+02 : f32
    %12 = vector.broadcast %cst_5 : f32 to vector<16x1xf32>
    %13 = arith.divf %11, %12 : vector<16x1xf32>
    %cst_6 = arith.constant 9.99999974E-6 : f32
    %14 = vector.broadcast %cst_6 : f32 to vector<16x1xf32>
    %15 = arith.addf %13, %14 : vector<16x1xf32>
    %16 = math.rsqrt %15 : vector<16x1xf32>
    %17 = vector.broadcast %16 : vector<16x1xf32> to vector<16x512xf32>
    %18 = arith.mulf %8, %17 : vector<16x512xf32>
    %c0_7 = arith.constant 0 : index
    %c0_8 = arith.constant 0 : index
    %19 = vector.load %arg3[%c0_7, %c0_8] : memref<1x512xf32, #tpu.memory_space<vmem>>, vector<1x512xf32>
    %20 = vector.broadcast %19 : vector<1x512xf32> to vector<16x512xf32>
    %21 = arith.mulf %18, %20 : vector<16x512xf32>
    %c0_9 = arith.constant 0 : index
    %c0_10 = arith.constant 0 : index
    %22 = vector.load %arg4[%c0_9, %c0_10] : memref<1x512xf32, #tpu.memory_space<vmem>>, vector<1x512xf32>
    %23 = vector.broadcast %22 : vector<1x512xf32> to vector<16x512xf32>
    %24 = arith.addf %21, %23 : vector<16x512xf32>
    %c0_11 = arith.constant 0 : index
    %c0_12 = arith.constant 0 : index
    %25 = vector.load %arg5[%c0_11, %c0_12] : memref<16x512xf32, #tpu.memory_space<vmem>>, vector<16x512xf32>
    tpu.vector_store %arg5[%c0_11, %c0_12], %24 {strides = array<i32>} : memref<16x512xf32, #tpu.memory_space<vmem>>, vector<16x512xf32>,
    return
  }
  func.func @transform_0(%arg0: i32) -> (i32, i32) {
    %c0_i32 = arith.constant 0 : i32
    %c0_i32_0 = arith.constant 0 : i32
    return %arg0, %c0_i32 : i32, i32
  }
  func.func @transform_1(%arg0: i32) -> (i32, i32) {
    %c0_i32 = arith.constant 0 : i32
    %c0_i32_0 = arith.constant 0 : i32
    return %arg0, %c0_i32 : i32, i32
  }
  func.func @transform_2(%arg0: i32) -> (i32, i32) {
    %c0_i32 = arith.constant 0 : i32
    %c0_i32_0 = arith.constant 0 : i32
    %c0_i32_1 = arith.constant 0 : i32
    return %c0_i32, %c0_i32_0 : i32, i32
  }
  func.func @transform_3(%arg0: i32) -> (i32, i32) {
    %c0_i32 = arith.constant 0 : i32
    %c0_i32_0 = arith.constant 0 : i32
    %c0_i32_1 = arith.constant 0 : i32
    return %c0_i32, %c0_i32_0 : i32, i32
  }
  func.func @transform_4(%arg0: i32) -> (i32, i32) {
    %c0_i32 = arith.constant 0 : i32
    %c0_i32_0 = arith.constant 0 : i32
    return %arg0, %c0_i32 : i32, i32
  }
}

</mosaic_0001>

<llo_original>
// kernel: tpu_custom_call.1
$region0: #{tpu_custom_call.1}
  #allocation0 [shape = 'u32[]', space=smem, size = 0x4, offset = 0x4, fixed_abs, tag = 'smem constant byte address 0x4 - core index']
  #allocation1 [shape = 'u32[72,128]{1,0:T(1,128)}', space=vmem, size = 0x9000, scoped, tag = 'internal scratch']
  %s0 = inlined_call_operand.hbm [shape: f32[16,512], index: 0, kind: input, shape index: {}]
  %s1 = inlined_call_operand.hbm [shape: f32[16,512], index: 1, kind: input, shape index: {}]
  %s2 = inlined_call_operand.hbm [shape: f32[1,512], index: 2, kind: input, shape index: {}]
  %s3 = inlined_call_operand.hbm [shape: f32[1,512], index: 3, kind: input, shape index: {}]
  %s4 = inlined_call_operand.hbm [shape: f32[16,512], index: 4, kind: output, shape index: {}]
  %s5 = sld [smem:[#allocation0]]
  $region42: #{tpu_custom_call.1} parent=0
    _
  %s7 = ssub.s32 1, %s5
  %s8 = scalar_select 0, %s7, %s5
  $region1: #{tpu_custom_call.1} parent=0
    #allocation2 [shape = 'u8[32768]{0}', space=vmem, size = 0x8000, scoped, tag = 'input window, operand 0, single buffered']
    #allocation3 [shape = 's32[1]{0}', space=sflag, size = 0x4, scoped, tag = 'scoped memory for tpu_custom_call.1']
    #allocation4 [shape = 's32[1]{0}', space=sflag, size = 0x4, scoped, tag = 'scoped memory for tpu_custom_call.1']
    #allocation5 [shape = 'u8[32768]{0}', space=vmem, size = 0x8000, scoped, tag = 'input window, operand 1, single buffered']
    #allocation6 [shape = 's32[1]{0}', space=sflag, size = 0x4, scoped, tag = 'scoped memory for tpu_custom_call.1']
    #allocation7 [shape = 'u8[2048]{0}', space=vmem, size = 0x800, scoped, tag = 'input window, operand 2, single buffered']
    #allocation8 [shape = 'u8[2048]{0}', space=vmem, size = 0x800, scoped, tag = 'input window, operand 3, single buffered']
    #allocation9 [shape = 's32[1]{0}', space=sflag, size = 0x4, scoped, tag = 'scoped memory for tpu_custom_call.1']
    #allocation10 [shape = 'u8[32768]{0}', space=vmem, size = 0x8000, scoped, tag = 'output window, operand 0, single buffered']
    %9 = vsyncpa [#allocation3], 0
    %10 = vsyncpa [#allocation6], 0
    %11 = vsyncpa [#allocation9], 0
    %12 = vsyncpa [#allocation4], 0
    // Predicated region
    $region2: #{tpu_custom_call.1} parent=1 // pred_check
      _
    $region3: #{tpu_custom_call.1} parent=1 // pred_check_branch
      %14 = sbr.rel (0) target = $region5
    $region4: #{tpu_custom_call.1} parent=1 // pred_region
      %16 = vsyncadd [#allocation3], 0
      %s17 = sshll.u32 %s0, 4
      %s18 = int_to_ptr.hbm [resolvable:$true] %s17
      %s19 = sshll.u32 [#allocation2], 4
      %s20 = int_to_ptr.vmem [resolvable:$true] %s19
      %25 = dma.hbm_to_vmem [thread:$0]  %s18, 1024, %s20, [#allocation3], 512, 512, 32
    $region5: #{tpu_custom_call.1} parent=1 // pred_fallthru
      _
    // Predicated region
    $region6: #{tpu_custom_call.1} parent=1 // pred_check
      _
    $region7: #{tpu_custom_call.1} parent=1 // pred_check_branch
      %27 = sbr.rel (0) target = $region9
    $region8: #{tpu_custom_call.1} parent=1 // pred_region
      %29 = vsyncadd [#allocation6], 0
      %s30 = sshll.u32 %s1, 4
      %s31 = int_to_ptr.hbm [resolvable:$true] %s30
      %s32 = sshll.u32 [#allocation5], 4
      %s33 = int_to_ptr.vmem [resolvable:$true] %s32
      %38 = dma.hbm_to_vmem [thread:$0]  %s31, 1024, %s33, [#allocation6], 512, 512, 32
    $region9: #{tpu_custom_call.1} parent=1 // pred_fallthru
      _
    // Predicated region
    $region10: #{tpu_custom_call.1} parent=1 // pred_check
      _
    $region11: #{tpu_custom_call.1} parent=1 // pred_check_branch
      %40 = sbr.rel (0) target = $region13
    $region12: #{tpu_custom_call.1} parent=1 // pred_region
      %42 = vsyncadd [#allocation6], 0
      %s44 = sshll.u32 %s2, 4
      %s45 = int_to_ptr.hbm [resolvable:$true] %s44
      %s46 = sshll.u32 [#allocation7], 4
      %s47 = int_to_ptr.vmem [resolvable:$true] %s46
      %49 = dma.hbm_to_vmem [thread:$0]  %s45, 64, %s47, [#allocation6]
    $region13: #{tpu_custom_call.1} parent=1 // pred_fallthru
      _
    // Predicated region
    $region14: #{tpu_custom_call.1} parent=1 // pred_check
      _
    $region15: #{tpu_custom_call.1} parent=1 // pred_check_branch
      %51 = sbr.rel (0) target = $region17
    $region16: #{tpu_custom_call.1} parent=1 // pred_region
      %53 = vsyncadd [#allocation9], 0
      %s55 = sshll.u32 %s3, 4
      %s56 = int_to_ptr.hbm [resolvable:$true] %s55
      %s57 = sshll.u32 [#allocation8], 4
      %s58 = int_to_ptr.vmem [resolvable:$true] %s57
      %60 = dma.hbm_to_vmem [thread:$0]  %s56, 64, %s58, [#allocation9]
    $region17: #{tpu_custom_call.1} parent=1 // pred_fallthru
      _
    // Predicated region
    $region18: #{tpu_custom_call.1} parent=1 // pred_check
      _
    $region19: #{tpu_custom_call.1} parent=1 // pred_check_branch
      %62 = sbr.rel (0) target = $region21
    $region20: #{tpu_custom_call.1} parent=1 // pred_region
      %64 = dma.done [#allocation3], 1024
    $region21: #{tpu_custom_call.1} parent=1 // pred_fallthru
      _
    // Predicated region
    $region22: #{tpu_custom_call.1} parent=1 // pred_check
      _
    $region23: #{tpu_custom_call.1} parent=1 // pred_check_branch
      %66 = sbr.rel (0) target = $region25
    $region24: #{tpu_custom_call.1} parent=1 // pred_region
      %68 = dma.done [#allocation6], 1024
    $region25: #{tpu_custom_call.1} parent=1 // pred_fallthru
      _
    // Predicated region
    $region26: #{tpu_custom_call.1} parent=1 // pred_check
      _
    $region27: #{tpu_custom_call.1} parent=1 // pred_check_branch
      %70 = sbr.rel (0) target = $region29
    $region28: #{tpu_custom_call.1} parent=1 // pred_region
      %72 = dma.done [#allocation6], 64
    $region29: #{tpu_custom_call.1} parent=1 // pred_fallthru
      _
    // Predicated region
    $region30: #{tpu_custom_call.1} parent=1 // pred_check
      _
    $region31: #{tpu_custom_call.1} parent=1 // pred_check_branch
      %74 = sbr.rel (0) target = $region33
    $region32: #{tpu_custom_call.1} parent=1 // pred_region
      %76 = dma.done [#allocation9], 64
    $region33: #{tpu_custom_call.1} parent=1 // pred_fallthru
      _
    %v77 = vld [vmem:[#allocation2] sm:$0xff]
    %v78 = vld [vmem:[#allocation2 + $0x8] sm:$0xff]
    %v79 = vld [vmem:[#allocation2 + $0x10] sm:$0xff]
    %v80 = vld [vmem:[#allocation2 + $0x18] sm:$0xff]
    %v81 = vld [vmem:[#allocation2 + $0x20] sm:$0xff]
    %v82 = vld [vmem:[#allocation2 + $0x28] sm:$0xff]
    %v83 = vld [vmem:[#allocation2 + $0x30] sm:$0xff]
    %v84 = vld [vmem:[#allocation2 + $0x38] sm:$0xff]
    %v85 = vld [vmem:[#allocation5] sm:$0xff]
    %v86 = vld [vmem:[#allocation5 + $0x8] sm:$0xff]
    %v87 = vld [vmem:[#allocation5 + $0x10] sm:$0xff]
    %v88 = vld [vmem:[#allocation5 + $0x18] sm:$0xff]
    %v89 = vld [vmem:[#allocation5 + $0x20] sm:$0xff]
    %v90 = vld [vmem:[#allocation5 + $0x28] sm:$0xff]
    %v91 = vld [vmem:[#allocation5 + $0x30] sm:$0xff]
    %v92 = vld [vmem:[#allocation5 + $0x38] sm:$0xff]
    %v93 = vadd.f32 %v77, %v85
    %v94 = vadd.f32 %v78, %v86
    %v95 = vadd.f32 %v79, %v87
    %v96 = vadd.f32 %v80, %v88
    %v97 = vadd.f32 %v81, %v89
    %v98 = vadd.f32 %v82, %v90
    %v99 = vadd.f32 %v83, %v91
    %v100 = vadd.f32 %v84, %v92
    %v101 = vadd.f32 %v93, %v94
    %v102 = vadd.f32 %v101, %v95
    %v103 = vadd.f32 %v102, %v96
    %104 = vadd.xlane.f32.xlu0 %v103
    %v105 = vpop.xlane.xlu0 %104
    %v106 = vadd.f32 %v97, %v98
    %v107 = vadd.f32 %v106, %v99
    %v108 = vadd.f32 %v107, %v100
    %109 = vadd.xlane.f32.xlu0 %v108
    %v110 = vpop.xlane.xlu0 %109
    %v111 = vrcp.pop 512.0
    %v112 = vmul.f32 512.0, %v111
    %v113 = vsub.f32 1.0, %v112
    %v114 = vmul.f32 %v111, %v113
    %v115 = vadd.f32 %v111, %v114
    %vm116 = vweird.f32 %v111
    %v117 = vsel %vm116, %v111, %v115
    %v118 = vmul.f32 %v105, %v117
    %v119 = vmul.f32 %v110, %v117
    %v120 = vsub.f32 %v93, %v118
    %v121 = vsub.f32 %v94, %v118
    %v122 = vsub.f32 %v95, %v118
    %v123 = vsub.f32 %v96, %v118
    %v124 = vsub.f32 %v97, %v119
    %v125 = vsub.f32 %v98, %v119
    %v126 = vsub.f32 %v99, %v119
    %v127 = vsub.f32 %v100, %v119
    %v128 = vmul.f32 %v120, %v120
    %v129 = vmul.f32 %v121, %v121
    %v130 = vmul.f32 %v122, %v122
    %v131 = vmul.f32 %v123, %v123
    %v132 = vmul.f32 %v124, %v124
    %v133 = vmul.f32 %v125, %v125
    %v134 = vmul.f32 %v126, %v126
    %v135 = vmul.f32 %v127, %v127
    %v136 = vadd.f32 %v128, %v129
    %v137 = vadd.f32 %v136, %v130
    %v138 = vadd.f32 %v137, %v131
    %139 = vadd.xlane.f32.xlu0 %v138
    %v140 = vpop.xlane.xlu0 %139
    %v141 = vadd.f32 %v132, %v133
    %v142 = vadd.f32 %v141, %v134
    %v143 = vadd.f32 %v142, %v135
    %144 = vadd.xlane.f32.xlu0 %v143
    %v145 = vpop.xlane.xlu0 %144
    %v146 = vmul.f32 %v140, %v117
    %v147 = vmul.f32 %v145, %v117
    %v148 = vadd.f32 %v146, 1e-05
    %v149 = vadd.f32 %v147, 1e-05
    %v150 = vrsqrt.pop %v148
    %v151 = vmul.f32 %v150, %v148
    %v152 = vmul.f32 %v151, %v150
    %v153 = vmul.f32 0.5, %v152
    %v154 = vsub.f32 1.5, %v153
    %v155 = vmul.f32 %v150, %v154
    %vm156 = vweird.f32 %v148
    %vm157 = vweird.f32 %v150
    %vm158 = vmor %vm156, %vm157
    %v159 = vsel %vm158, %v150, %v155
    %v160 = vrsqrt.pop %v149
    %v161 = vmul.f32 %v160, %v149
    %v162 = vmul.f32 %v161, %v160
    %v163 = vmul.f32 0.5, %v162
    %v164 = vsub.f32 1.5, %v163
    %v165 = vmul.f32 %v160, %v164
    %vm166 = vweird.f32 %v149
    %vm167 = vweird.f32 %v160
    %vm168 = vmor %vm166, %vm167
    %v169 = vsel %vm168, %v160, %v165
    %v170 = vmul.f32 %v120, %v159
    %v171 = vmul.f32 %v121, %v159
    %v172 = vmul.f32 %v122, %v159
    %v173 = vmul.f32 %v123, %v159
    %v174 = vmul.f32 %v124, %v169
    %v175 = vmul.f32 %v125, %v169
    %v176 = vmul.f32 %v126, %v169
    %v177 = vmul.f32 %v127, %v169
    %v178 = vld [vmem:[#allocation7] sm:$0xf]
    %v180 = vperm.slane %v178, 0
    %v181 = vperm.slane %v178, 1
    %v182 = vperm.slane %v178, 2
    %v183 = vperm.slane %v178, 3
    %v188 = vmul.f32 %v170, %v180
    %v189 = vmul.f32 %v171, %v181
    %v190 = vmul.f32 %v172, %v182
    %v191 = vmul.f32 %v173, %v183
    %v192 = vmul.f32 %v174, %v180
    %v193 = vmul.f32 %v175, %v181
    %v194 = vmul.f32 %v176, %v182
    %v195 = vmul.f32 %v177, %v183
    %v196 = vld [vmem:[#allocation8] sm:$0xf]
    %v198 = vperm.slane %v196, 0
    %v199 = vperm.slane %v196, 1
    %v200 = vperm.slane %v196, 2
    %v201 = vperm.slane %v196, 3
    %v206 = vadd.f32 %v188, %v198
    %v207 = vadd.f32 %v189, %v199
    %v208 = vadd.f32 %v190, %v200
    %v209 = vadd.f32 %v191, %v201
    %v210 = vadd.f32 %v192, %v198
    %v211 = vadd.f32 %v193, %v199
    %v212 = vadd.f32 %v194, %v200
    %v213 = vadd.f32 %v195, %v201
    %214 = vst [vmem:[#allocation10] sm:$0xff] %v206
    %215 = vst [vmem:[#allocation10 + $0x8] sm:$0xff] %v207
    %216 = vst [vmem:[#allocation10 + $0x10] sm:$0xff] %v208
    %217 = vst [vmem:[#allocation10 + $0x18] sm:$0xff] %v209
    %218 = vst [vmem:[#allocation10 + $0x20] sm:$0xff] %v210
    %219 = vst [vmem:[#allocation10 + $0x28] sm:$0xff] %v211
    %220 = vst [vmem:[#allocation10 + $0x30] sm:$0xff] %v212
    %221 = vst [vmem:[#allocation10 + $0x38] sm:$0xff] %v213
    // Predicated region
    $region34: #{tpu_custom_call.1} parent=1 // pred_check
      _
    $region35: #{tpu_custom_call.1} parent=1 // pred_check_branch
      %223 = sbr.rel (0) target = $region37
    $region36: #{tpu_custom_call.1} parent=1 // pred_region
      %225 = vsyncadd [#allocation4], 0
      %s226 = sshll.u32 [#allocation10], 4
      %s227 = int_to_ptr.vmem [resolvable:$true] %s226
      %s228 = sshll.u32 %s4, 4
      %s229 = int_to_ptr.hbm [resolvable:$true] %s228
      %234 = dma.vmem_to_hbm [thread:$0]  %s227, 1024, %s229, [#allocation4], 512, 512, 32
    $region37: #{tpu_custom_call.1} parent=1 // pred_fallthru
      _
    // Predicated region
    $region38: #{tpu_custom_call.1} parent=1 // pred_check
      _
    $region39: #{tpu_custom_call.1} parent=1 // pred_check_branch
      %236 = sbr.rel (0) target = $region41
    $region40: #{tpu_custom_call.1} parent=1 // pred_region
      %238 = dma.done [#allocation4], 1024
    $region41: #{tpu_custom_call.1} parent=1 // pred_fallthru
      _
    %239 = vsyncpa [#allocation3], 1
    %240 = vsyncpa [#allocation6], 1
    %241 = vsyncpa [#allocation9], 1
    %242 = vsyncpa [#allocation4], 1

</llo_original>
